<compile_context>
chip_gen: v7x
topology: tpu7x:2x2x1
jax: 0.10.0
libtpu: 0.0.40
codegen_flags: <defaults>
</compile_context>

<pallas_src>
import functools

import jax
import jax.numpy as jnp
from jax.experimental import pallas as pl
from jax.experimental.pallas import tpu as pltpu

_LANE = 128
_MIB = 1024 * 1024
# Total target for all in-flight Pallas VMEM buffers (double-buffered input
# tiles + double-buffered output column + f32 accumulator).  Conservative for
# v7x (64 MiB physical VMEM per TC); v5e/v6e (128 MiB) have ample headroom.
_VMEM_TARGET = 32 * _MIB
_VMEM_LIMIT_CAP = 48 * _MIB


def _round_up(x, m):
    return ((x + m - 1) // m) * m


def _cdiv(a, b):
    return -(-a // b)


def _gap_kernel_single(x_ref, o_ref, *, inv_hw):
    """Whole HW in one tile: no scratch, no predication.

    x_ref: (tm, hw) tile; o_ref: (tm, 1).
    """
    s = jnp.sum(x_ref[...], axis=-1, keepdims=True, dtype=jnp.float32)
    o_ref[...] = (s * inv_hw).astype(o_ref.dtype)


def _gap_kernel_tiled(x_ref, o_ref, acc_ref, *, inv_hw, hw, tk, mask_tail):
    """HW split across grid axis 1 (only for enormous spatial sizes).

    x_ref: (tm, tk) tile; o_ref: (tm, 1); acc_ref: (tm, 1) f32 scratch.
    """
    k = pl.program_id(1)

    @pl.when(k == 0)
    def _init():
        acc_ref[...] = jnp.zeros_like(acc_ref)

    x = x_ref[...]
    if mask_tail:
        # The last HW tile runs past the true extent; out-of-range lanes hold
        # unspecified pad values -> zero them (sum-neutral; divide by true hw).
        col = jax.lax.broadcasted_iota(jnp.int32, x.shape, x.ndim - 1)
        x = jnp.where(col + k * tk < hw, x, jnp.zeros_like(x))

    # Accumulate in f32 without materializing a full-tile f32 upcast.
    acc_ref[...] += jnp.sum(x, axis=-1, keepdims=True, dtype=jnp.float32)

    @pl.when(k == pl.num_programs(1) - 1)
    def _finalize():
        o_ref[...] = (acc_ref[...] * inv_hw).astype(o_ref.dtype)


def global_avg_pool2d(x, *, _force_hw_tile=None):
    """(N, C, H, W) -> (N, C, 1, 1), mean over spatial dims (== F.avg_pool2d(x, (H, W)))."""
    n, c, h, w = x.shape
    nc, hw = n * c, h * w
    x2 = x.reshape(nc, hw)                       # free reshape, no HBM copy

    itemsize = jnp.dtype(x.dtype).itemsize
    # Sublane packing of the dtype (f32: 8, bf16/f16: 16, int8/fp8: 32).
    row_align = {1: 32, 2: 16}.get(itemsize, 8)

    # Layout-aware per-row VMEM cost of one grid step (lane dim padded to 128):
    #   2x double-buffered input rows + 2x output-column rows (+ f32 acc rows).
    def _budget_rows(tk_, with_acc):
        per_row = itemsize * (2 * _round_up(tk_, _LANE) + 2 * _LANE)
        if with_acc:
            per_row += 4 * _LANE
        return _VMEM_TARGET // per_row

    # ---- HW (reduction / lane) tiling -------------------------------------
    # Keep the whole HW extent in one tile whenever at least `row_align` rows
    # still fit the VMEM budget (true for any realistic spatial size, e.g.
    # 224*224 f32).  Only truly enormous HW falls back to the accumulator path.
    if _force_hw_tile is not None and _force_hw_tile < hw:
        tk = _force_hw_tile                      # test hook; multiple of 128
    elif _budget_rows(hw, with_acc=False) >= row_align:
        tk = hw
    else:
        tk = 128 * 1024                          # multiple of 128
        while tk > _LANE and _budget_rows(tk, with_acc=True) < row_align:
            tk //= 2
    grid_k = _cdiv(hw, tk) if tk < hw else 1
    mask_tail = (grid_k > 1) and (hw % tk != 0)

    # ---- NC (row / sublane) tiling ----------------------------------------
    # No 512-row cap: size tm from the VMEM budget alone, aligned to the
    # dtype's sublane packing, and split into >= 2 row tiles when nc is big
    # enough so both TensorCores get work on v7x.
    budget_rows = _budget_rows(tk, with_acc=grid_k > 1)
    budget_rows = max(row_align, (budget_rows // row_align) * row_align)

    grid_m = max(1, _cdiv(nc, budget_rows))
    if nc >= 4 * row_align:
        grid_m = max(grid_m, 2)
    tm = min(budget_rows, _round_up(_cdiv(nc, grid_m), row_align))
    if tm >= nc:
        tm = nc                                  # full-extent block: always legal
    grid_m = _cdiv(nc, tm)

    inv_hw = 1.0 / float(hw)

    if grid_k == 1:
        kernel = functools.partial(_gap_kernel_single, inv_hw=inv_hw)
        grid = (grid_m,)
        in_specs = [pl.BlockSpec((tm, tk), lambda i: (i, 0))]
        out_specs = pl.BlockSpec((tm, 1), lambda i: (i, 0))
        scratch_shapes = []
        dim_sem = ("parallel",)
    else:
        kernel = functools.partial(_gap_kernel_tiled, inv_hw=inv_hw, hw=hw,
                                   tk=tk, mask_tail=mask_tail)
        grid = (grid_m, grid_k)
        in_specs = [pl.BlockSpec((tm, tk), lambda i, k: (i, k))]
        out_specs = pl.BlockSpec((tm, 1), lambda i, k: (i, 0))
        scratch_shapes = [pltpu.VMEM((tm, 1), jnp.float32)]
        dim_sem = ("parallel", "arbitrary")

    # Layout-aware VMEM accounting for the compiler limit (<= 48 MiB so it is
    # valid on v7x's 64 MiB VMEM; explicit so v5e's 16 MiB default is lifted).
    need = (2 * tm * _round_up(tk, _LANE) * itemsize                 # input x2
            + 2 * _round_up(tm, row_align) * _LANE * itemsize)       # out column x2
    if grid_k > 1:
        need += _round_up(tm, 8) * _LANE * 4                         # f32 acc
    vmem_limit = max(32 * _MIB, min(_VMEM_LIMIT_CAP,
                                    _round_up(need, _MIB) + 8 * _MIB))

    out = pl.pallas_call(
        kernel,
        out_shape=jax.ShapeDtypeStruct((nc, 1), x.dtype),
        grid_spec=pltpu.PrefetchScalarGridSpec(
            num_scalar_prefetch=0,
            grid=grid,
            in_specs=in_specs,
            out_specs=out_specs,
            scratch_shapes=scratch_shapes,
        ),
        compiler_params=pltpu.CompilerParams(
            dimension_semantics=dim_sem,
            vmem_limit_bytes=vmem_limit,
        ),
        cost_estimate=pl.CostEstimate(
            flops=nc * hw,
            transcendentals=0,
            bytes_accessed=nc * hw * itemsize + nc * itemsize,
        ),
    )(x2)

    # TODO(synk): lane-dense (1, tm) output blocks (review item) were evaluated
    # but skipped: they need a sublane->lane relayout of the row sums that costs
    # roughly what the masked column stores cost; the column output buffer is
    # instead charged to the VMEM budget above so input tiles stay multi-MiB.
    return out.reshape(n, c, 1, 1)


if __name__ == "__main__":
    key = jax.random.PRNGKey(0)

    def _ref(v):
        return jnp.mean(v.astype(jnp.float32), axis=(2, 3), keepdims=True)

    # 1) Primary shape implied by the module.
    x = jax.random.normal(key, (2, 4, 16, 16), dtype=jnp.float32)
    y = jax.block_until_ready(global_avg_pool2d(x))
    assert y.shape == (2, 4, 1, 1)
    assert jnp.allclose(y, _ref(x), atol=1e-5, rtol=1e-5)

    # 2) Odd spatial / odd channel count (full-extent blocks, nc not a multiple of 8).
    x2 = jax.random.normal(jax.random.PRNGKey(1), (2, 3, 7, 7), dtype=jnp.float32)
    y2 = jax.block_until_ready(global_avg_pool2d(x2))
    assert y2.shape == (2, 3, 1, 1)
    assert jnp.allclose(y2, _ref(x2), atol=1e-5, rtol=1e-5)

    # 3) bf16 input (exercises 16-row sublane packing).
    x3 = jax.random.normal(jax.random.PRNGKey(2), (2, 4, 16, 16)).astype(jnp.bfloat16)
    y3 = jax.block_until_ready(global_avg_pool2d(x3))
    assert y3.dtype == jnp.bfloat16 and y3.shape == (2, 4, 1, 1)
    assert jnp.allclose(y3.astype(jnp.float32), _ref(x3), atol=2e-2, rtol=2e-2)

    # 4) nc large enough to split the parallel axis into 2 row tiles, with a
    #    partial trailing row block (no wrapper-side padding anywhere).
    x4 = jax.random.normal(jax.random.PRNGKey(3), (3, 20, 8, 8), dtype=jnp.float32)
    y4 = jax.block_until_ready(global_avg_pool2d(x4))
    assert y4.shape == (3, 20, 1, 1)
    assert jnp.allclose(y4, _ref(x4), atol=1e-5, rtol=1e-5)

    # 5) Force the tiled-HW accumulator path with a masked tail (208 % 128 != 0).
    x5 = jax.random.normal(jax.random.PRNGKey(4), (2, 4, 16, 13), dtype=jnp.float32)
    y5 = jax.block_until_ready(global_avg_pool2d(x5, _force_hw_tile=128))
    assert y5.shape == (2, 4, 1, 1)
    assert jnp.allclose(y5, _ref(x5), atol=1e-5, rtol=1e-5)

    print("KERNEL_OK")
</pallas_src>

<mosaic_0001>
module attributes {stable_mosaic.version = 11 : i64} {
  func.func @_gap_kernel_single(%arg0: i32, %arg1: memref<8x256xf32, #tpu.memory_space<vmem>>, %arg2: memref<8x1xf32, #tpu.memory_space<vmem>>) attributes {dimension_semantics = [#tpu.dimension_semantics<parallel>], iteration_bounds = array<i64: 1>, scalar_prefetch = 0 : i64, scratch_operands = 0 : i64, tpu.core_type = #tpu.core_type<tc>, window_params = [{transform_indices = @transform_0, window_bounds = array<i64: 8, 256>}, {transform_indices = @transform_1, window_bounds = array<i64: 8, 1>}]} {
    %c0 = arith.constant 0 : index
    %c0_0 = arith.constant 0 : index
    %0 = vector.load %arg1[%c0, %c0_0] : memref<8x256xf32, #tpu.memory_space<vmem>>, vector<8x256xf32>
    %cst = arith.constant dense<0.000000e+00> : vector<8xf32>
    %1 = vector.multi_reduction <add>, %0, %cst [1] : vector<8x256xf32> to vector<8xf32>
    %2 = vector.shape_cast %1 : vector<8xf32> to vector<8x1xf32>
    %cst_1 = arith.constant 3.906250e-03 : f32
    %3 = vector.broadcast %cst_1 : f32 to vector<8x1xf32>
    %4 = arith.mulf %2, %3 : vector<8x1xf32>
    %c0_2 = arith.constant 0 : index
    %c0_3 = arith.constant 0 : index
    %5 = vector.load %arg2[%c0_2, %c0_3] : memref<8x1xf32, #tpu.memory_space<vmem>>, vector<8x1xf32>
    tpu.vector_store %arg2[%c0_2, %c0_3], %4 {strides = array<i32>} : memref<8x1xf32, #tpu.memory_space<vmem>>, vector<8x1xf32>,
    return
  }
  func.func @transform_0(%arg0: i32) -> (i32, i32) {
    %c0_i32 = arith.constant 0 : i32
    %c0_i32_0 = arith.constant 0 : i32
    return %arg0, %c0_i32 : i32, i32
  }
  func.func @transform_1(%arg0: i32) -> (i32, i32) {
    %c0_i32 = arith.constant 0 : i32
    %c0_i32_0 = arith.constant 0 : i32
    return %arg0, %c0_i32 : i32, i32
  }
}

</mosaic_0001>

<llo_original>
// kernel: tpu_custom_call.1
$region0: #{tpu_custom_call.1}
  #allocation0 [shape = 'u32[]', space=smem, size = 0x4, offset = 0x4, fixed_abs, tag = 'smem constant byte address 0x4 - core index']
  #allocation1 [shape = 'u32[144,128]{1,0:T(1,128)}', space=vmem, size = 0x12000, scoped, tag = 'internal scratch']
  %s0 = inlined_call_operand.hbm [shape: f32[8,256], index: 0, kind: input, shape index: {}]
  %s1 = inlined_call_operand.vmem [shape: f32[8,1], index: 1, kind: output, shape index: {}]
  %s2 = sld [smem:[#allocation0]]
  $region18: #{tpu_custom_call.1} parent=0
    _
  %s4 = ssub.s32 1, %s2
  %s5 = scalar_select 0, %s4, %s2
  $region1: #{tpu_custom_call.1} parent=0
    #allocation2 [shape = 'u8[8192]{0}', space=vmem, size = 0x2000, scoped, tag = 'input window, operand 0, single buffered']
    #allocation3 [shape = 's32[1]{0}', space=sflag, size = 0x4, scoped, tag = 'scoped memory for tpu_custom_call.1']
    %6 = vsyncpa [#allocation3], 0
    // Predicated region
    $region2: #{tpu_custom_call.1} parent=1 // pred_check
      _
    $region3: #{tpu_custom_call.1} parent=1 // pred_check_branch
      %8 = sbr.rel (0) target = $region5
    $region4: #{tpu_custom_call.1} parent=1 // pred_region
      %s10 = ssub.s32 256, 256
      %11 = vsyncadd [#allocation3], %s10
      %s13 = sshll.u32 [#allocation2], 4
      %s14 = int_to_ptr.vmem [resolvable:$true] %s13
      %16 = dma.hbm_to_vmem [thread:$0]  %s0, 256, %s14, [#allocation3]
    $region5: #{tpu_custom_call.1} parent=1 // pred_fallthru
      _
    // Predicated region
    $region6: #{tpu_custom_call.1} parent=1 // pred_check
      _
    $region7: #{tpu_custom_call.1} parent=1 // pred_check_branch
      %18 = sbr.rel (0) target = $region9
    $region8: #{tpu_custom_call.1} parent=1 // pred_region
      %19 = dma.done [#allocation3], 256
    $region9: #{tpu_custom_call.1} parent=1 // pred_fallthru
      _
    %v20 = vld [vmem:[#allocation2] sm:$0xff]
    %v21 = vld [vmem:[#allocation2 + $0x8] sm:$0xff]
    %v22 = vadd.f32 %v20, %v21
    %23 = vadd.xlane.f32.xlu0 %v22
    %v24 = vpop.xlane.xlu0 %23
    %v25 = vmul.f32 %v24, 0.00390625
    %vm26 = vcmask 7168
    %27 = vst.msk [vmem:[%s1] sm:$0xff] %vm26, %v25
    // Predicated region
    $region10: #{tpu_custom_call.1} parent=1 // pred_check
      _
    $region11: #{tpu_custom_call.1} parent=1 // pred_check_branch
      %29 = sbr.rel (0) target = $region13
    $region12: #{tpu_custom_call.1} parent=1 // pred_region
      _
    $region13: #{tpu_custom_call.1} parent=1 // pred_fallthru
      _
    // Predicated region
    $region14: #{tpu_custom_call.1} parent=1 // pred_check
      _
    $region15: #{tpu_custom_call.1} parent=1 // pred_check_branch
      %31 = sbr.rel (0) target = $region17
    $region16: #{tpu_custom_call.1} parent=1 // pred_region
      _
    $region17: #{tpu_custom_call.1} parent=1 // pred_fallthru
      _
    %32 = vsyncpa [#allocation3], 1

</llo_original>
